<compile_context>
chip_gen: v7x
topology: tpu7x:2x2x1
jax: 0.10.0
libtpu: 0.0.40
codegen_flags: <defaults>
</compile_context>

<pallas_src>
import functools

import jax
import jax.numpy as jnp
from jax.experimental import pallas as pl
from jax.experimental.pallas import tpu as pltpu

BN_EPS = 1e-5          # nn.BatchNorm2d default
LANE = 128
_VMEM_LIMIT = 32 * 1024 * 1024


def _round_up(x, m):
    return ((x + m - 1) // m) * m


def _conv_relu_stats_kernel(p_ref, w_ref, b_ref, y_ref, sum_ref, ssq_ref,
                            *, m_rows, tile_m):
    # MXU: bf16 x bf16 -> f32 accumulation.
    y = jnp.dot(p_ref[...], w_ref[...], preferred_element_type=jnp.float32)
    y = jnp.maximum(y + b_ref[...], 0.0)             # conv bias + ReLU (f32 VPU)
    y_ref[...] = y

    # Per-tile BatchNorm partial statistics; mask rows past the real M so
    # zero-padded rows (which ReLU(bias) would otherwise pollute) are excluded.
    tm, cp = y.shape
    row0 = pl.program_id(0) * tile_m
    rows = row0 + jax.lax.broadcasted_iota(jnp.int32, (tm, 1), 0)
    ym = jnp.where(rows < m_rows, y, 0.0)
    s = jnp.sum(ym, axis=0, keepdims=True)           # (1, Cp)
    ss = jnp.sum(ym * ym, axis=0, keepdims=True)     # (1, Cp)
    sum_ref[...] = jnp.broadcast_to(s.reshape(1, 1, cp), (1, 8, cp))
    ssq_ref[...] = jnp.broadcast_to(ss.reshape(1, 1, cp), (1, 8, cp))


def _bn_affine_kernel(y_ref, scale_ref, shift_ref, o_ref):
    # Normalize + affine folded into a single FMA: y*scale + shift.
    o_ref[...] = y_ref[...] * scale_ref[...] + shift_ref[...]


def conv_relu_bn(x_nchw, weight, bias, gamma, beta, *, size=3, stride=1,
                 tile_m=256):
    """x_nchw: (N, Cin, H, W); weight: (Cout, Cin, K, K) (PyTorch OIHW)."""
    # TODO(synk): only stride=1 (the module default) is implemented.
    assert stride == 1, "stride != 1 not implemented"
    N, Cin, H, W = x_nchw.shape
    Cout = weight.shape[0]
    K = size
    pad = K // 2

    M = N * H * W
    KC = K * K * Cin
    KCp = _round_up(KC, LANE)                 # lane-dense contraction depth
    Cp = _round_up(Cout, LANE)                # lane-dense output channels
    TM = _round_up(min(tile_m, _round_up(M, 16)), 16)
    Mp = _round_up(M, TM)
    n_tiles = Mp // TM

    # ---- glue: im2col (pure layout), kept in bf16 to halve HBM traffic ----
    # TODO(synk): im2col still materializes a K*K-inflated activation slab in
    # HBM; an on-chip tap loop with halo DMA would cut that traffic ~9x more.
    x_bf16 = jnp.transpose(x_nchw, (0, 2, 3, 1)).astype(jnp.bfloat16)
    x_pad = jnp.pad(x_bf16, ((0, 0), (pad, pad), (pad, pad), (0, 0)))
    taps = []
    for kh in range(K):
        for kw in range(K):
            taps.append(x_pad[:, kh:kh + H, kw:kw + W, :])
    patches = jnp.concatenate(taps, axis=-1).reshape(M, KC)
    patches = jnp.pad(patches, ((0, Mp - M), (0, KCp - KC)))

    # weight (Cout, Cin, K, K) -> (K, K, Cin, Cout) -> (KC, Cout), pad, bf16
    w_mat = jnp.transpose(weight, (2, 3, 1, 0)).reshape(KC, Cout)
    w_mat = jnp.pad(w_mat, ((0, KCp - KC), (0, Cp - Cout))).astype(jnp.bfloat16)
    b_row = jnp.pad(bias.astype(jnp.float32), (0, Cp - Cout)).reshape(1, Cp)

    # ---- pass 1: conv matmul + bias + ReLU + per-tile BN partial sums ----
    kernel1 = functools.partial(_conv_relu_stats_kernel, m_rows=M, tile_m=TM)
    y_flat, psum, pssq = pl.pallas_call(
        kernel1,
        out_shape=(
            jax.ShapeDtypeStruct((Mp, Cp), jnp.float32),
            jax.ShapeDtypeStruct((n_tiles, 8, Cp), jnp.float32),
            jax.ShapeDtypeStruct((n_tiles, 8, Cp), jnp.float32),
        ),
        grid=(n_tiles,),
        in_specs=[
            pl.BlockSpec((TM, KCp), lambda i: (i, 0)),      # im2col patches (bf16)
            pl.BlockSpec((KCp, Cp), lambda i: (0, 0)),      # conv weights (bf16)
            pl.BlockSpec((1, Cp), lambda i: (0, 0)),        # conv bias (f32)
        ],
        out_specs=(
            pl.BlockSpec((TM, Cp), lambda i: (i, 0)),       # y = relu(conv)
            pl.BlockSpec((1, 8, Cp), lambda i: (i, 0, 0)),  # partial sums
            pl.BlockSpec((1, 8, Cp), lambda i: (i, 0, 0)),  # partial sum-of-squares
        ),
        compiler_params=pltpu.CompilerParams(
            dimension_semantics=("parallel",),
            vmem_limit_bytes=_VMEM_LIMIT),
    )(patches, w_mat, b_row)

    # ---- tiny glue: fold partials into per-channel scale / shift ----
    total = jnp.sum(psum[:, 0, :], axis=0)
    total_sq = jnp.sum(pssq[:, 0, :], axis=0)
    mean = total / M
    var = jnp.maximum(total_sq / M - mean * mean, 0.0)   # biased (training) var
    inv_std = jax.lax.rsqrt(var + BN_EPS)
    gamma_p = jnp.pad(gamma.astype(jnp.float32), (0, Cp - Cout))
    beta_p = jnp.pad(beta.astype(jnp.float32), (0, Cp - Cout))
    scale = gamma_p * inv_std
    shift = beta_p - mean * scale
    scale_row = scale.reshape(1, Cp)
    shift_row = shift.reshape(1, Cp)

    # ---- pass 2: normalize + affine (tiled, parallel, lane-dense stores) ----
    out_flat = pl.pallas_call(
        _bn_affine_kernel,
        out_shape=jax.ShapeDtypeStruct((Mp, Cp), jnp.float32),
        grid=(n_tiles,),
        in_specs=[
            pl.BlockSpec((TM, Cp), lambda i: (i, 0)),
            pl.BlockSpec((1, Cp), lambda i: (0, 0)),
            pl.BlockSpec((1, Cp), lambda i: (0, 0)),
        ],
        out_specs=pl.BlockSpec((TM, Cp), lambda i: (i, 0)),
        compiler_params=pltpu.CompilerParams(
            dimension_semantics=("parallel",),
            vmem_limit_bytes=_VMEM_LIMIT),
    )(y_flat, scale_row, shift_row)

    out = out_flat[:M, :Cout].reshape(N, H, W, Cout)
    return jnp.transpose(out, (0, 3, 1, 2))  # back to NCHW


if __name__ == "__main__":
    key = jax.random.PRNGKey(0)
    k1, k2, k3 = jax.random.split(key, 3)

    # small shapes consistent with the module: inplanes=4, planes=8
    N, Cin, Cout, H, W = 2, 4, 8, 16, 16
    x = jax.random.normal(k1, (N, Cin, H, W), jnp.float32)

    weight = 0.1 * jax.random.normal(k2, (Cout, Cin, 3, 3), jnp.float32)
    bias = 0.1 * jax.random.normal(k3, (Cout,), jnp.float32)
    gamma = jnp.ones((Cout,), jnp.float32)   # BatchNorm2d default weight
    beta = jnp.zeros((Cout,), jnp.float32)   # BatchNorm2d default bias

    out = conv_relu_bn(x, weight, bias, gamma, beta)
    out = jax.block_until_ready(out)

    # silent correctness check against a pure-JAX reference.  The kernel feeds
    # the MXU bf16 inputs with f32 accumulation, so the reference uses the same
    # bf16-rounded conv inputs; everything else is f32.
    x_q = x.astype(jnp.bfloat16).astype(jnp.float32)
    w_q = weight.astype(jnp.bfloat16).astype(jnp.float32)
    y = jax.lax.conv_general_dilated(
        x_q, w_q, window_strides=(1, 1), padding=((1, 1), (1, 1)),
        dimension_numbers=("NCHW", "OIHW", "NCHW"),
        precision=jax.lax.Precision.HIGHEST)
    y = jnp.maximum(y + bias[None, :, None, None], 0.0)
    mean = jnp.mean(y, axis=(0, 2, 3), keepdims=True)
    var = jnp.mean(jnp.square(y - mean), axis=(0, 2, 3), keepdims=True)
    ref = (y - mean) * jax.lax.rsqrt(var + BN_EPS)
    ref = ref * gamma[None, :, None, None] + beta[None, :, None, None]

    assert out.shape == (N, Cout, H, W)
    assert jnp.allclose(out, ref, atol=2e-3, rtol=2e-3), float(
        jnp.max(jnp.abs(out - ref)))

    print("KERNEL_OK")
</pallas_src>

<mosaic_0001>
module attributes {stable_mosaic.version = 11 : i64} {
  func.func @_conv_relu_stats_kernel(%arg0: i32, %arg1: memref<256x128xbf16, #tpu.memory_space<vmem>>, %arg2: memref<128x128xbf16, #tpu.memory_space<vmem>>, %arg3: memref<1x128xf32, #tpu.memory_space<vmem>>, %arg4: memref<256x128xf32, #tpu.memory_space<vmem>>, %arg5: memref<1x8x128xf32, #tpu.memory_space<vmem>>, %arg6: memref<1x8x128xf32, #tpu.memory_space<vmem>>) attributes {dimension_semantics = [#tpu.dimension_semantics<parallel>], iteration_bounds = array<i64: 2>, scalar_prefetch = 0 : i64, scratch_operands = 0 : i64, tpu.core_type = #tpu.core_type<tc>, window_params = [{transform_indices = @transform_0, window_bounds = array<i64: 256, 128>}, {pipeline_mode = #tpu.pipeline_mode<synchronous>, transform_indices = @transform_1, window_bounds = array<i64: 128, 128>}, {pipeline_mode = #tpu.pipeline_mode<synchronous>, transform_indices = @transform_2, window_bounds = array<i64: 1, 128>}, {transform_indices = @transform_3, window_bounds = array<i64: 256, 128>}, {transform_indices = @transform_4, window_bounds = array<i64: 1, 8, 128>}, {transform_indices = @transform_5, window_bounds = array<i64: 1, 8, 128>}]} {
    %c0 = arith.constant 0 : index
    %c0_0 = arith.constant 0 : index
    %0 = vector.load %arg1[%c0, %c0_0] : memref<256x128xbf16, #tpu.memory_space<vmem>>, vector<256x128xbf16>
    %c0_1 = arith.constant 0 : index
    %c0_2 = arith.constant 0 : index
    %1 = vector.load %arg2[%c0_1, %c0_2] : memref<128x128xbf16, #tpu.memory_space<vmem>>, vector<128x128xbf16>
    %cst = arith.constant dense<0.000000e+00> : vector<256x128xf32>
    %2 = tpu.matmul %0, %1, %cst {dimension_numbers = #tpu.dot_dimension_numbers<[1], [0], [0], [1], [0, 0, 1, 1], [], []>} : vector<256x128xbf16>, vector<128x128xbf16>, vector<256x128xf32> -> vector<256x128xf32>
    %c0_3 = arith.constant 0 : index
    %c0_4 = arith.constant 0 : index
    %3 = vector.load %arg3[%c0_3, %c0_4] : memref<1x128xf32, #tpu.memory_space<vmem>>, vector<1x128xf32>
    %4 = vector.broadcast %3 : vector<1x128xf32> to vector<256x128xf32>
    %5 = arith.addf %2, %4 : vector<256x128xf32>
    %cst_5 = arith.constant 0.000000e+00 : f32
    %6 = vector.broadcast %cst_5 : f32 to vector<256x128xf32>
    %7 = arith.maximumf %5, %6 : vector<256x128xf32>
    %c0_6 = arith.constant 0 : index
    %c0_7 = arith.constant 0 : index
    %8 = vector.load %arg4[%c0_6, %c0_7] : memref<256x128xf32, #tpu.memory_space<vmem>>, vector<256x128xf32>
    tpu.vector_store %arg4[%c0_6, %c0_7], %7 {strides = array<i32>} : memref<256x128xf32, #tpu.memory_space<vmem>>, vector<256x128xf32>,
    %c256_i32 = arith.constant 256 : i32
    %9 = arith.muli %arg0, %c256_i32 : i32
    %10 = tpu.iota {dimensions = array<i32: 0>} : vector<256x1xi32>
    %11 = vector.broadcast %9 : i32 to vector<256x1xi32>
    %12 = arith.addi %11, %10 : vector<256x1xi32>
    %c512_i32 = arith.constant 512 : i32
    %13 = vector.broadcast %c512_i32 : i32 to vector<256x1xi32>
    %14 = arith.cmpi slt, %12, %13 : vector<256x1xi32>
    %cst_8 = arith.constant 0.000000e+00 : f32
    %15 = vector.shape_cast %14 : vector<256x1xi1> to vector<256x1xi1>
    %16 = vector.broadcast %15 : vector<256x1xi1> to vector<256x128xi1>
    %17 = vector.broadcast %cst_8 : f32 to vector<256x128xf32>
    %18 = arith.select %16, %7, %17 : vector<256x128xi1>, vector<256x128xf32>
    %cst_9 = arith.constant dense<0.000000e+00> : vector<128xf32>
    %19 = vector.multi_reduction <add>, %18, %cst_9 [0] : vector<256x128xf32> to vector<128xf32>
    %20 = vector.shape_cast %19 : vector<128xf32> to vector<1x128xf32>
    %21 = arith.mulf %18, %18 : vector<256x128xf32>
    %cst_10 = arith.constant dense<0.000000e+00> : vector<128xf32>
    %22 = vector.multi_reduction <add>, %21, %cst_10 [0] : vector<256x128xf32> to vector<128xf32>
    %23 = vector.shape_cast %22 : vector<128xf32> to vector<1x128xf32>
    %24 = vector.shape_cast %20 : vector<1x128xf32> to vector<1x1x128xf32>
    %25 = vector.shape_cast %24 : vector<1x1x128xf32> to vector<1x1x128xf32>
    %26 = vector.broadcast %25 : vector<1x1x128xf32> to vector<1x8x128xf32>
    %c0_11 = arith.constant 0 : index
    %c0_12 = arith.constant 0 : index
    %c0_13 = arith.constant 0 : index
    %27 = vector.load %arg5[%c0_11, %c0_12, %c0_13] : memref<1x8x128xf32, #tpu.memory_space<vmem>>, vector<1x8x128xf32>
    tpu.vector_store %arg5[%c0_11, %c0_12, %c0_13], %26 {strides = array<i32>} : memref<1x8x128xf32, #tpu.memory_space<vmem>>, vector<1x8x128xf32>,
    %28 = vector.shape_cast %23 : vector<1x128xf32> to vector<1x1x128xf32>
    %29 = vector.shape_cast %28 : vector<1x1x128xf32> to vector<1x1x128xf32>
    %30 = vector.broadcast %29 : vector<1x1x128xf32> to vector<1x8x128xf32>
    %c0_14 = arith.constant 0 : index
    %c0_15 = arith.constant 0 : index
    %c0_16 = arith.constant 0 : index
    %31 = vector.load %arg6[%c0_14, %c0_15, %c0_16] : memref<1x8x128xf32, #tpu.memory_space<vmem>>, vector<1x8x128xf32>
    tpu.vector_store %arg6[%c0_14, %c0_15, %c0_16], %30 {strides = array<i32>} : memref<1x8x128xf32, #tpu.memory_space<vmem>>, vector<1x8x128xf32>,
    return
  }
  func.func @transform_0(%arg0: i32) -> (i32, i32) {
    %c0_i32 = arith.constant 0 : i32
    %c0_i32_0 = arith.constant 0 : i32
    return %arg0, %c0_i32 : i32, i32
  }
  func.func @transform_1(%arg0: i32) -> (i32, i32) {
    %c0_i32 = arith.constant 0 : i32
    %c0_i32_0 = arith.constant 0 : i32
    %c0_i32_1 = arith.constant 0 : i32
    return %c0_i32, %c0_i32_0 : i32, i32
  }
  func.func @transform_2(%arg0: i32) -> (i32, i32) {
    %c0_i32 = arith.constant 0 : i32
    %c0_i32_0 = arith.constant 0 : i32
    %c0_i32_1 = arith.constant 0 : i32
    return %c0_i32, %c0_i32_0 : i32, i32
  }
  func.func @transform_3(%arg0: i32) -> (i32, i32) {
    %c0_i32 = arith.constant 0 : i32
    %c0_i32_0 = arith.constant 0 : i32
    return %arg0, %c0_i32 : i32, i32
  }
  func.func @transform_4(%arg0: i32) -> (i32, i32, i32) {
    %c0_i32 = arith.constant 0 : i32
    %c0_i32_0 = arith.constant 0 : i32
    %c0_i32_1 = arith.constant 0 : i32
    return %arg0, %c0_i32, %c0_i32_0 : i32, i32, i32
  }
  func.func @transform_5(%arg0: i32) -> (i32, i32, i32) {
    %c0_i32 = arith.constant 0 : i32
    %c0_i32_0 = arith.constant 0 : i32
    %c0_i32_1 = arith.constant 0 : i32
    return %arg0, %c0_i32, %c0_i32_0 : i32, i32, i32
  }
}

</mosaic_0001>

<llo_original>
// kernel: tpu_custom_call.1
$region0: #{tpu_custom_call.1}
  #allocation0 [shape = 'u32[]', space=smem, size = 0x4, offset = 0x4, fixed_abs, tag = 'smem constant byte address 0x4 - core index']
  #allocation1 [shape = 'u32[144,128]{1,0:T(1,128)}', space=vmem, size = 0x12000, scoped, tag = 'internal scratch']
  %s0 = inlined_call_operand.hbm [shape: bf16[512,128], index: 0, kind: input, shape index: {}]
  %s1 = inlined_call_operand.hbm [shape: bf16[128,128], index: 1, kind: input, shape index: {}]
  %s2 = inlined_call_operand.vmem [shape: f32[1,128], index: 2, kind: input, shape index: {}]
  %s3 = inlined_call_operand.hbm [shape: f32[512,128], index: 3, kind: output, shape index: {0}]
  %s4 = inlined_call_operand.hbm [shape: f32[2,8,128], index: 4, kind: output, shape index: {1}]
  %s5 = inlined_call_operand.hbm [shape: f32[2,8,128], index: 5, kind: output, shape index: {2}]
  %6 = xla_tuple %s3, %s4, %s5
  %s7 = sld [smem:[#allocation0]]
  $region69: #{tpu_custom_call.1} parent=0
    _
  %s9 = ssub.s32 1, %s7
  %s10 = scalar_select 0, %s9, %s7
  $region1: #{tpu_custom_call.1} parent=0
    #allocation2 [shape = 'u8[131072]{0}', space=vmem, size = 0x20000, scoped, tag = 'input window, operand 0']
    #allocation3 [shape = 's32[2]{0}', space=sflag, size = 0x8, scoped, tag = 'scoped memory for tpu_custom_call.1']
    #allocation4 [shape = 's32[2]{0}', space=sflag, size = 0x8, scoped, tag = 'scoped memory for tpu_custom_call.1']
    #allocation5 [shape = 'u8[32768]{0}', space=vmem, size = 0x8000, scoped, tag = 'input window, operand 1, single buffered']
    #allocation6 [shape = 's32[1]{0}', space=sflag, size = 0x4, scoped, tag = 'scoped memory for tpu_custom_call.1']
    #allocation7 [shape = 'u8[262144]{0}', space=vmem, size = 0x40000, scoped, tag = 'output window, operand 0']
    #allocation8 [shape = 'u8[8192]{0}', space=vmem, size = 0x2000, scoped, tag = 'output window, operand 1']
    #allocation9 [shape = 's32[2]{0}', space=sflag, size = 0x8, scoped, tag = 'scoped memory for tpu_custom_call.1']
    #allocation10 [shape = 'u8[8192]{0}', space=vmem, size = 0x2000, scoped, tag = 'output window, operand 2']
    %11 = vsyncpa [#allocation3], 0
    %s12 = scalar_lea.sflag [#allocation3], 1
    %13 = vsyncpa %s12, 0
    %14 = vsyncpa [#allocation6], 0
    %15 = vsyncpa [#allocation4], 0
    %s16 = scalar_lea.sflag [#allocation4], 1
    %17 = vsyncpa %s16, 0
    %18 = vsyncpa [#allocation9], 0
    %s19 = scalar_lea.sflag [#allocation9], 1
    %20 = vsyncpa %s19, 0
    loop: start=0, step=1, limit=4
    $region2: #{tpu_custom_call.1} parent=1 // loop_pre_header
      _
    $region3: #{tpu_custom_call.1} parent=1 // loop_header
      %s22 = sphi 0, %s26
      %p23 = scmp.ge.s32.totalorder %s22, 4
      %s32 = sphi 0, %s34
      %s35 = sphi 0, %s32
      %s36 = sphi 0, %s35
      %s52 = sphi 0, %s36
      %s56 = sphi 0, %s56
      %s58 = sphi 0, %s56
      %s59 = sphi 0, %s58
      %s73 = sphi 0, %s59
      %s77 = sphi 0, %s77
      %s79 = sphi 0, %s77
      %s80 = sphi 0, %s79
      %s94 = sphi 0, %s80
      %s100 = sphi 0, %s102
      %s103 = sphi 0, %s100
      %s104 = sphi 0, %s103
      %s120 = sphi 0, %s104
      %s126 = sphi 0, %s128
      %s129 = sphi 0, %s126
      %s130 = sphi 0, %s129
      %s146 = sphi 0, %s130
      %s152 = sphi 0, %s154
      %s155 = sphi 0, %s152
      %s156 = sphi 0, %s155
      %s172 = sphi 0, %s156
    $region4: #{tpu_custom_call.1} parent=1 // loop_header_branch
      %25 = sbr.rel (%p23) target = $region8
    $region5: #{tpu_custom_call.1} parent=1 // loop_body
      %s27 = ssub.s32 %s22, 1
      %s28 = ssub.s32 %s22, 2
      %s29 = sadd.s32 %s22, 1
      %s30 = ssub.s32 %s22, %s29
      %p31 = scmp.eq.s32.totalorder %s30, 0
      %s33 = sadd.s32 %s32, 1
      %s34 = scalar_select %p31, %s32, %s33
      %p37 = pneg %p31
      %p38 = scmp.eq.s32.totalorder %s22, 1
      %p39 = por %p37, %p38
      %p40 = scmp.ne.s32.totalorder %s32, %s35
      %p41 = scmp.eq.s32.totalorder %s22, 0
      %p42 = por %p40, %p41
      %p43 = scmp.ne.s32.totalorder %s32, %s35
      %p44 = scmp.eq.s32.totalorder %s27, 1
      %p45 = por %p43, %p44
      %p46 = scmp.ne.s32.totalorder %s35, %s36
      %p47 = scmp.eq.s32.totalorder %s27, 0
      %p48 = por %p46, %p47
      %p49 = scmp.ne.s32.totalorder %s35, %s36
      %p50 = scmp.eq.s32.totalorder %s28, 1
      %p51 = por %p49, %p50
      %p53 = scmp.ne.s32.totalorder %s36, %s52
      %p54 = scmp.eq.s32.totalorder %s28, 0
      %p55 = por %p53, %p54
      %s57 = sadd.s32 %s56, 1
      %p60 = scmp.eq.s32.totalorder %s22, 1
      %p61 = scmp.ne.s32.totalorder %s56, %s58
      %p62 = scmp.eq.s32.totalorder %s22, 0
      %p63 = por %p61, %p62
      %p64 = scmp.ne.s32.totalorder %s56, %s58
      %p65 = scmp.eq.s32.totalorder %s27, 1
      %p66 = por %p64, %p65
      %p67 = scmp.ne.s32.totalorder %s58, %s59
      %p68 = scmp.eq.s32.totalorder %s27, 0
      %p69 = por %p67, %p68
      %p70 = scmp.ne.s32.totalorder %s58, %s59
      %p71 = scmp.eq.s32.totalorder %s28, 1
      %p72 = por %p70, %p71
      %p74 = scmp.ne.s32.totalorder %s59, %s73
      %p75 = scmp.eq.s32.totalorder %s28, 0
      %p76 = por %p74, %p75
      %s78 = sadd.s32 %s77, 1
      %p81 = scmp.eq.s32.totalorder %s22, 1
      %p82 = scmp.ne.s32.totalorder %s77, %s79
      %p83 = scmp.eq.s32.totalorder %s22, 0
      %p84 = por %p82, %p83
      %p85 = scmp.ne.s32.totalorder %s77, %s79
      %p86 = scmp.eq.s32.totalorder %s27, 1
      %p87 = por %p85, %p86
      %p88 = scmp.ne.s32.totalorder %s79, %s80
      %p89 = scmp.eq.s32.totalorder %s27, 0
      %p90 = por %p88, %p89
      %p91 = scmp.ne.s32.totalorder %s79, %s80
      %p92 = scmp.eq.s32.totalorder %s28, 1
      %p93 = por %p91, %p92
      %p95 = scmp.ne.s32.totalorder %s80, %s94
      %p96 = scmp.eq.s32.totalorder %s28, 0
      %p97 = por %p95, %p96
      %s98 = ssub.s32 %s22, %s29
      %p99 = scmp.eq.s32.totalorder %s98, 0
      %s101 = sadd.s32 %s100, 1
      %s102 = scalar_select %p99, %s100, %s101
      %p105 = pneg %p99
      %p106 = scmp.eq.s32.totalorder %s22, 1
      %p107 = por %p105, %p106
      %p108 = scmp.ne.s32.totalorder %s100, %s103
      %p109 = scmp.eq.s32.totalorder %s22, 0
      %p110 = por %p108, %p109
      %p111 = scmp.ne.s32.totalorder %s100, %s103
      %p112 = scmp.eq.s32.totalorder %s27, 1
      %p113 = por %p111, %p112
      %p114 = scmp.ne.s32.totalorder %s103, %s104
      %p115 = scmp.eq.s32.totalorder %s27, 0
      %p116 = por %p114, %p115
      %p117 = scmp.ne.s32.totalorder %s103, %s104
      %p118 = scmp.eq.s32.totalorder %s28, 1
      %p119 = por %p117, %p118
      %p121 = scmp.ne.s32.totalorder %s104, %s120
      %p122 = scmp.eq.s32.totalorder %s28, 0
      %p123 = por %p121, %p122
      %s124 = ssub.s32 %s22, %s29
      %p125 = scmp.eq.s32.totalorder %s124, 0
      %s127 = sadd.s32 %s126, 1
      %s128 = scalar_select %p125, %s126, %s127
      %p131 = pneg %p125
      %p132 = scmp.eq.s32.totalorder %s22, 1
      %p133 = por %p131, %p132
      %p134 = scmp.ne.s32.totalorder %s126, %s129
      %p135 = scmp.eq.s32.totalorder %s22, 0
      %p136 = por %p134, %p135
      %p137 = scmp.ne.s32.totalorder %s126, %s129
      %p138 = scmp.eq.s32.totalorder %s27, 1
      %p139 = por %p137, %p138
      %p140 = scmp.ne.s32.totalorder %s129, %s130
      %p141 = scmp.eq.s32.totalorder %s27, 0
      %p142 = por %p140, %p141
      %p143 = scmp.ne.s32.totalorder %s129, %s130
      %p144 = scmp.eq.s32.totalorder %s28, 1
      %p145 = por %p143, %p144
      %p147 = scmp.ne.s32.totalorder %s130, %s146
      %p148 = scmp.eq.s32.totalorder %s28, 0
      %p149 = por %p147, %p148
      %s150 = ssub.s32 %s22, %s29
      %p151 = scmp.eq.s32.totalorder %s150, 0
      %s153 = sadd.s32 %s152, 1
      %s154 = scalar_select %p151, %s152, %s153
      %p157 = pneg %p151
      %p158 = scmp.eq.s32.totalorder %s22, 1
      %p159 = por %p157, %p158
      %p160 = scmp.ne.s32.totalorder %s152, %s155
      %p161 = scmp.eq.s32.totalorder %s22, 0
      %p162 = por %p160, %p161
      %p163 = scmp.ne.s32.totalorder %s152, %s155
      %p164 = scmp.eq.s32.totalorder %s27, 1
      %p165 = por %p163, %p164
      %p166 = scmp.ne.s32.totalorder %s155, %s156
      %p167 = scmp.eq.s32.totalorder %s27, 0
      %p168 = por %p166, %p167
      %p169 = scmp.ne.s32.totalorder %s155, %s156
      %p170 = scmp.eq.s32.totalorder %s28, 1
      %p171 = por %p169, %p170
      %p173 = scmp.ne.s32.totalorder %s156, %s172
      %p174 = scmp.eq.s32.totalorder %s28, 0
      %p175 = por %p173, %p174
      %p176 = scmp.le.s32.totalorder 1, %s22
      %p177 = scmp.lt.s32.totalorder %s22, 3
      %p178 = pnand %p176, %p177
      %p179 = pneg %p178
      // Predicated region
      $region9: #{tpu_custom_call.1} parent=5 // pred_check
        _
      $region10: #{tpu_custom_call.1} parent=5 // pred_check_branch
        %181 = sbr.rel (%p178) target = $region12
      $region11: #{tpu_custom_call.1} parent=5 // pred_region
        %s182 = ssub.s32 %s22, 1
        // Predicated region
        $region13: #{tpu_custom_call.1} parent=11 // pred_check
          %p183 = pneg %p69
        $region14: #{tpu_custom_call.1} parent=11 // pred_check_branch
          %185 = sbr.rel (%p183) target = $region16
        $region15: #{tpu_custom_call.1} parent=11 // pred_region
          %s187 = ssub.s32 1024, 1024
          %188 = vsyncadd [#allocation6], %s187
          %s189 = sshll.u32 [#allocation5], 4
          %s190 = int_to_ptr.vmem [resolvable:$true] %s189
          %195 = dma.hbm_to_vmem [thread:$0]  %s1, 1024, %s190, [#allocation6], 64, 64, 4
        $region16: #{tpu_custom_call.1} parent=11 // pred_fallthru
          _
        // Predicated region
        $region17: #{tpu_custom_call.1} parent=11 // pred_check
          %p196 = pneg %p90
        $region18: #{tpu_custom_call.1} parent=11 // pred_check_branch
          %198 = sbr.rel (%p196) target = $region20
        $region19: #{tpu_custom_call.1} parent=11 // pred_region
          _
        $region20: #{tpu_custom_call.1} parent=11 // pred_fallthru
          _
      $region12: #{tpu_custom_call.1} parent=5 // pred_fallthru
        _
      %p199 = scmp.lt.s32.totalorder %s22, 2
      // Predicated region
      $region21: #{tpu_custom_call.1} parent=5 // pred_check
        %p200 = pneg %p199
      $region22: #{tpu_custom_call.1} parent=5 // pred_check_branch
        %202 = sbr.rel (%p200) target = $region24
      $region23: #{tpu_custom_call.1} parent=5 // pred_region
        // Predicated region
        $region25: #{tpu_custom_call.1} parent=23 // pred_check
          %p203 = pneg %p42
        $region26: #{tpu_custom_call.1} parent=23 // pred_check_branch
          %205 = sbr.rel (%p203) target = $region28
        $region27: #{tpu_custom_call.1} parent=23 // pred_region
          %s206 = sand.u32 %s32, 1
          %s207 = scalar_lea.sflag [#allocation3], %s206
          %s208 = sand.u32 %s32, 1
          %s209 = smul.addr %s208, 128
          %s210 = scalar_lea.vmem [#allocation2], %s209
          %s211 = smul.u32 32, %s22
          %s213 = ssub.s32 2048, 2048
          %214 = vsyncadd %s207, %s213
          %s215 = smul.addr %s211, 64
          %s216 = scalar_lea.hbm %s0, %s215
          %s217 = sshll.u32 %s210, 4
          %s218 = int_to_ptr.vmem [resolvable:$true] %s217
          %223 = dma.hbm_to_vmem [thread:$0]  %s216, 2048, %s218, %s207, 64, 64, 4
        $region28: #{tpu_custom_call.1} parent=23 // pred_fallthru
          _
      $region24: #{tpu_custom_call.1} parent=5 // pred_fallthru
        _
      %p224 = scmp.le.s32.totalorder 1, %s22
      %p225 = scmp.lt.s32.totalorder %s22, 3
      %p226 = pnand %p224, %p225
      %p227 = pneg %p226
      // Predicated region
      $region29: #{tpu_custom_call.1} parent=5 // pred_check
        _
      $region30: #{tpu_custom_call.1} parent=5 // pred_check_branch
        %229 = sbr.rel (%p226) target = $region32
      $region31: #{tpu_custom_call.1} parent=5 // pred_region
        %s230 = ssub.s32 %s22, 1
        %s231 = sand.u32 %s35, 1
        %s232 = scalar_lea.sflag [#allocation3], %s231
        %s233 = sand.u32 %s35, 1
        %s234 = smul.addr %s233, 128
        %s235 = scalar_lea.vmem [#allocation2], %s234
        // Predicated region
        $region33: #{tpu_custom_call.1} parent=31 // pred_check
          %p236 = pneg %p48
        $region34: #{tpu_custom_call.1} parent=31 // pred_check_branch
          %238 = sbr.rel (%p236) target = $region36
        $region35: #{tpu_custom_call.1} parent=31 // pred_region
          %239 = dma.done %s232, 2048
        $region36: #{tpu_custom_call.1} parent=31 // pred_fallthru
          _
        // Predicated region
        $region37: #{tpu_custom_call.1} parent=31 // pred_check
          %p240 = pneg %p69
        $region38: #{tpu_custom_call.1} parent=31 // pred_check_branch
          %242 = sbr.rel (%p240) target = $region40
        $region39: #{tpu_custom_call.1} parent=31 // pred_region
          %243 = dma.done [#allocation6], 1024
        $region40: #{tpu_custom_call.1} parent=31 // pred_fallthru
          _
        %s244 = sand.u32 %s35, 1
        %s245 = scalar_lea.sflag [#allocation3], %s244
        %s246 = sand.u32 %s35, 1
        %s247 = smul.addr %s246, 128
        %s248 = scalar_lea.vmem [#allocation2], %s247
        %p249 = pneg %p48
        %p250 = pneg %p45
        %p251 = pneg %p69
        %p252 = pneg %p66
        %p253 = pneg %p90
        %p254 = pneg %p87
        %p255 = pneg %p116
        %p256 = pneg %p113
        %s257 = sand.u32 %s103, 1
        %s258 = scalar_lea.sflag [#allocation4], %s257
        %s259 = sand.u32 %s103, 1
        %s260 = smul.addr %s259, 256
        %s261 = scalar_lea.vmem [#allocation7], %s260
        %p262 = pneg %p142
        %p263 = pneg %p139
        %s264 = sand.u32 %s27, 1
        %s265 = scalar_lea.sflag [#allocation9], %s264
        %s266 = sand.u32 %s129, 1
        %s267 = smul.addr %s266, 8
        %s268 = scalar_lea.vmem [#allocation8], %s267
        %p269 = pneg %p168
        %p270 = pneg %p165
        %s271 = sand.u32 %s27, 1
        %s272 = scalar_lea.sflag [#allocation9], %s271
        %s273 = sand.u32 %s155, 1
        %s274 = smul.addr %s273, 8
        %s275 = scalar_lea.vmem [#allocation10], %s274
        %s276 = smul.u32 32, %s27
        %s277 = smul.u32 32, %s27
        %v279 = vld [vmem:[%s235] sm:$0xf]
        %v280 = vld [vmem:[%s235 + $0x4] sm:$0xf]
        %v281 = vld [vmem:[%s235 + $0x8] sm:$0xf]
        %v282 = vld [vmem:[%s235 + $0xc] sm:$0xf]
        %v283 = vld [vmem:[%s235 + $0x10] sm:$0xf]
        %v284 = vld [vmem:[%s235 + $0x14] sm:$0xf]
        %v285 = vld [vmem:[%s235 + $0x18] sm:$0xf]
        %v286 = vld [vmem:[%s235 + $0x1c] sm:$0xf]
        %v287 = vld [vmem:[%s235 + $0x20] sm:$0xf]
        %v288 = vld [vmem:[%s235 + $0x24] sm:$0xf]
        %v289 = vld [vmem:[%s235 + $0x28] sm:$0xf]
        %v290 = vld [vmem:[%s235 + $0x2c] sm:$0xf]
        %v291 = vld [vmem:[%s235 + $0x30] sm:$0xf]
        %v292 = vld [vmem:[%s235 + $0x34] sm:$0xf]
        %v293 = vld [vmem:[%s235 + $0x38] sm:$0xf]
        %v294 = vld [vmem:[%s235 + $0x3c] sm:$0xf]
        %v295 = vld [vmem:[%s235 + $0x40] sm:$0xf]
        %v296 = vld [vmem:[%s235 + $0x44] sm:$0xf]
        %v297 = vld [vmem:[%s235 + $0x48] sm:$0xf]
        %v298 = vld [vmem:[%s235 + $0x4c] sm:$0xf]
        %v299 = vld [vmem:[%s235 + $0x50] sm:$0xf]
        %v300 = vld [vmem:[%s235 + $0x54] sm:$0xf]
        %v301 = vld [vmem:[%s235 + $0x58] sm:$0xf]
        %v302 = vld [vmem:[%s235 + $0x5c] sm:$0xf]
        %v303 = vld [vmem:[%s235 + $0x60] sm:$0xf]
        %v304 = vld [vmem:[%s235 + $0x64] sm:$0xf]
        %v305 = vld [vmem:[%s235 + $0x68] sm:$0xf]
        %v306 = vld [vmem:[%s235 + $0x6c] sm:$0xf]
        %v307 = vld [vmem:[%s235 + $0x70] sm:$0xf]
        %v308 = vld [vmem:[%s235 + $0x74] sm:$0xf]
        %v309 = vld [vmem:[%s235 + $0x78] sm:$0xf]
        %v310 = vld [vmem:[%s235 + $0x7c] sm:$0xf]
        %v311 = vld [vmem:[#allocation5] sm:$0xf]
        %v312 = vld [vmem:[#allocation5 + $0x4] sm:$0xf]
        %v313 = vld [vmem:[#allocation5 + $0x8] sm:$0xf]
        %v314 = vld [vmem:[#allocation5 + $0xc] sm:$0xf]
        %v315 = vld [vmem:[#allocation5 + $0x10] sm:$0xf]
        %v316 = vld [vmem:[#allocation5 + $0x14] sm:$0xf]
        %v317 = vld [vmem:[#allocation5 + $0x18] sm:$0xf]
        %v318 = vld [vmem:[#allocation5 + $0x1c] sm:$0xf]
        %v319 = vld [vmem:[#allocation5 + $0x20] sm:$0xf]
        %v320 = vld [vmem:[#allocation5 + $0x24] sm:$0xf]
        %v321 = vld [vmem:[#allocation5 + $0x28] sm:$0xf]
        %v322 = vld [vmem:[#allocation5 + $0x2c] sm:$0xf]
        %v323 = vld [vmem:[#allocation5 + $0x30] sm:$0xf]
        %v324 = vld [vmem:[#allocation5 + $0x34] sm:$0xf]
        %v325 = vld [vmem:[#allocation5 + $0x38] sm:$0xf]
        %v326 = vld [vmem:[#allocation5 + $0x3c] sm:$0xf]
        %v327 = vld [vmem:[%s2] sm:$0x1]
        %v329 = vlaneseq
        %v330 = vshrl.u32 %v329, 7
        %v331 = vsub.s32 0, %v330
        %v332 = vrot.slane %v327, %v331
        %v366 = vunpack.c.l.b16 %v279
        %v367 = vunpack.c.l.b16 %v280
        %v368 = vunpack.c.l.b16 %v281
        %v369 = vunpack.c.l.b16 %v282
        %v370 = vunpack.c.l.b16 %v283
        %v371 = vunpack.c.l.b16 %v284
        %v372 = vunpack.c.l.b16 %v285
        %v373 = vunpack.c.l.b16 %v286
        %v374 = vunpack.c.l.b16 %v287
        %v375 = vunpack.c.l.b16 %v288
        %v376 = vunpack.c.l.b16 %v289
        %v377 = vunpack.c.l.b16 %v290
        %v378 = vunpack.c.l.b16 %v291
        %v379 = vunpack.c.l.b16 %v292
        %v380 = vunpack.c.l.b16 %v293
        %v381 = vunpack.c.l.b16 %v294
        %v382 = vunpack.c.l.b16 %v295
        %v383 = vunpack.c.l.b16 %v296
        %v384 = vunpack.c.l.b16 %v297
        %v385 = vunpack.c.l.b16 %v298
        %v386 = vunpack.c.l.b16 %v299
        %v387 = vunpack.c.l.b16 %v300
        %v388 = vunpack.c.l.b16 %v301
        %v389 = vunpack.c.l.b16 %v302
        %v390 = vunpack.c.l.b16 %v303
        %v391 = vunpack.c.l.b16 %v304
        %v392 = vunpack.c.l.b16 %v305
        %v393 = vunpack.c.l.b16 %v306
        %v394 = vunpack.c.l.b16 %v307
        %v395 = vunpack.c.l.b16 %v308
        %v396 = vunpack.c.l.b16 %v309
        %v397 = vunpack.c.l.b16 %v310
        %v398 = vpack.c.b16 %v367, %v366
        %v399 = vpack.c.b16 %v369, %v368
        %v400 = vpack.c.b16 %v371, %v370
        %v401 = vpack.c.b16 %v373, %v372
        %v402 = vpack.c.b16 %v375, %v374
        %v403 = vpack.c.b16 %v377, %v376
        %v404 = vpack.c.b16 %v379, %v378
        %v405 = vpack.c.b16 %v381, %v380
        %v406 = vpack.c.b16 %v383, %v382
        %v407 = vpack.c.b16 %v385, %v384
        %v408 = vpack.c.b16 %v387, %v386
        %v409 = vpack.c.b16 %v389, %v388
        %v410 = vpack.c.b16 %v391, %v390
        %v411 = vpack.c.b16 %v393, %v392
        %v412 = vpack.c.b16 %v395, %v394
        %v413 = vpack.c.b16 %v397, %v396
        %v446 = vunpack.c.l.b16 %v311
        %v447 = vunpack.c.l.b16 %v312
        %v448 = vunpack.c.l.b16 %v313
        %v449 = vunpack.c.l.b16 %v314
        %v450 = vunpack.c.l.b16 %v315
        %v451 = vunpack.c.l.b16 %v316
        %v452 = vunpack.c.l.b16 %v317
        %v453 = vunpack.c.l.b16 %v318
        %v454 = vunpack.c.l.b16 %v319
        %v455 = vunpack.c.l.b16 %v320
        %v456 = vunpack.c.l.b16 %v321
        %v457 = vunpack.c.l.b16 %v322
        %v458 = vunpack.c.l.b16 %v323
        %v459 = vunpack.c.l.b16 %v324
        %v460 = vunpack.c.l.b16 %v325
        %v461 = vunpack.c.l.b16 %v326
        %v462 = vpack.c.b16 %v447, %v446
        %v463 = vpack.c.b16 %v449, %v448
        %v464 = vpack.c.b16 %v451, %v450
        %v465 = vpack.c.b16 %v453, %v452
        %v466 = vpack.c.b16 %v455, %v454
        %v467 = vpack.c.b16 %v457, %v456
        %v468 = vpack.c.b16 %v459, %v458
        %v469 = vpack.c.b16 %v461, %v460
        %478 = vmatprep.subr.bf16.mxu0 0
        %479 = vmatpush1.bf16.msra.mxu0 %v462
        %480 = vmatprep.subr.bf16.mxu0 0
        %481 = vmatpush1.bf16.msra.mxu0 %v463
        %482 = vmatprep.subr.bf16.mxu0 0
        %483 = vmatpush1.bf16.msra.mxu0 %v464
        %484 = vmatprep.subr.bf16.mxu0 0
        %485 = vmatpush1.bf16.msra.mxu0 %v465
        %486 = vmatprep.subr.bf16.mxu0 0
        %487 = vmatpush1.bf16.msra.mxu0 %v466
        %488 = vmatprep.subr.bf16.mxu0 0
        %489 = vmatpush1.bf16.msra.mxu0 %v467
        %490 = vmatprep.subr.bf16.mxu0 0
        %491 = vmatpush1.bf16.msra.mxu0 %v468
        %492 = vmatprep.subr.bf16.mxu0 0
        %493 = vmatpush1.bf16.msra.mxu0 %v469
        %494 = vmatprep.subr.bf16.mxu0 0
        %495 = vmatpush1.bf16.msra.mxu0 0
        %496 = vmatprep.subr.bf16.mxu0 0
        %497 = vmatpush1.bf16.msra.mxu0 0
        %498 = vmatprep.subr.bf16.mxu0 0
        %499 = vmatpush1.bf16.msra.mxu0 0
        %500 = vmatprep.subr.bf16.mxu0 0
        %501 = vmatpush1.bf16.msra.mxu0 0
        %502 = vmatprep.subr.bf16.mxu0 0
        %503 = vmatpush1.bf16.msra.mxu0 0
        %504 = vmatprep.subr.bf16.mxu0 0
        %505 = vmatpush1.bf16.msra.mxu0 0
        %506 = vmatprep.subr.bf16.mxu0 0
        %507 = vmatpush1.bf16.msra.mxu0 0
        %508 = vmatprep.subr.bf16.mxu0 0
        %509 = vmatpush1.bf16.msra.mxu0 0
        %510 = vmatprep.mubr.bf16.mxu0 0
        %511 = vmatmul.mubr.bf16.gmra.mrb[0].mxu0 %v398
        %v512 = vpop.f32.mrb[0].mxu0
        %v513 = vadd.f32 %v332, %v512
        %v514 = vpop.f32.mrb[0].mxu0
        %v515 = vpop.f32.mrb[0].mxu0
        %v516 = vadd.f32 %v332, %v515
        %v517 = vpop.f32.mrb[0].mxu0
        %518 = vmatprep.mubr.bf16.mxu0 0
        %519 = vmatmul.mubr.bf16.gmra.mrb[0].mxu0 %v399
        %v520 = vpop.f32.mrb[0].mxu0
        %v521 = vadd.f32 %v332, %v520
        %v522 = vpop.f32.mrb[0].mxu0
        %v523 = vpop.f32.mrb[0].mxu0
        %v524 = vadd.f32 %v332, %v523
        %v525 = vpop.f32.mrb[0].mxu0
        %526 = vmatprep.mubr.bf16.mxu0 0
        %527 = vmatmul.mubr.bf16.gmra.mrb[0].mxu0 %v400
        %v528 = vpop.f32.mrb[0].mxu0
        %v529 = vadd.f32 %v332, %v528
        %v530 = vpop.f32.mrb[0].mxu0
        %v531 = vpop.f32.mrb[0].mxu0
        %v532 = vadd.f32 %v332, %v531
        %v533 = vpop.f32.mrb[0].mxu0
        %534 = vmatprep.mubr.bf16.mxu0 0
        %535 = vmatmul.mubr.bf16.gmra.mrb[0].mxu0 %v401
        %v536 = vpop.f32.mrb[0].mxu0
        %v537 = vadd.f32 %v332, %v536
        %v538 = vpop.f32.mrb[0].mxu0
        %v539 = vpop.f32.mrb[0].mxu0
        %v540 = vadd.f32 %v332, %v539
        %v541 = vpop.f32.mrb[0].mxu0
        %542 = vmatprep.mubr.bf16.mxu0 0
        %543 = vmatmul.mubr.bf16.gmra.mrb[0].mxu0 %v402
        %v544 = vpop.f32.mrb[0].mxu0
        %v545 = vadd.f32 %v332, %v544
        %v546 = vpop.f32.mrb[0].mxu0
        %v547 = vpop.f32.mrb[0].mxu0
        %v548 = vadd.f32 %v332, %v547
        %v549 = vpop.f32.mrb[0].mxu0
        %550 = vmatprep.mubr.bf16.mxu0 0
        %551 = vmatmul.mubr.bf16.gmra.mrb[0].mxu0 %v403
        %v552 = vpop.f32.mrb[0].mxu0
        %v553 = vadd.f32 %v332, %v552
        %v554 = vpop.f32.mrb[0].mxu0
        %v555 = vpop.f32.mrb[0].mxu0
        %v556 = vadd.f32 %v332, %v555
        %v557 = vpop.f32.mrb[0].mxu0
        %558 = vmatprep.mubr.bf16.mxu0 0
        %559 = vmatmul.mubr.bf16.gmra.mrb[0].mxu0 %v404
        %v560 = vpop.f32.mrb[0].mxu0
        %v561 = vadd.f32 %v332, %v560
        %v562 = vpop.f32.mrb[0].mxu0
        %v563 = vpop.f32.mrb[0].mxu0
        %v564 = vadd.f32 %v332, %v563
        %v565 = vpop.f32.mrb[0].mxu0
        %566 = vmatprep.mubr.bf16.mxu0 0
        %567 = vmatmul.mubr.bf16.gmra.mrb[0].mxu0 %v405
        %v568 = vpop.f32.mrb[0].mxu0
        %v569 = vadd.f32 %v332, %v568
        %v570 = vpop.f32.mrb[0].mxu0
        %v571 = vpop.f32.mrb[0].mxu0
        %v572 = vadd.f32 %v332, %v571
        %v573 = vpop.f32.mrb[0].mxu0
        %574 = vmatprep.mubr.bf16.mxu0 0
        %575 = vmatmul.mubr.bf16.gmra.mrb[0].mxu0 %v406
        %v576 = vpop.f32.mrb[0].mxu0
        %v577 = vadd.f32 %v332, %v576
        %v578 = vpop.f32.mrb[0].mxu0
        %v579 = vpop.f32.mrb[0].mxu0
        %v580 = vadd.f32 %v332, %v579
        %v581 = vpop.f32.mrb[0].mxu0
        %582 = vmatprep.mubr.bf16.mxu0 0
        %583 = vmatmul.mubr.bf16.gmra.mrb[0].mxu0 %v407
        %v584 = vpop.f32.mrb[0].mxu0
        %v585 = vadd.f32 %v332, %v584
        %v586 = vpop.f32.mrb[0].mxu0
        %v587 = vpop.f32.mrb[0].mxu0
        %v588 = vadd.f32 %v332, %v587
        %v589 = vpop.f32.mrb[0].mxu0
        %590 = vmatprep.mubr.bf16.mxu0 0
        %591 = vmatmul.mubr.bf16.gmra.mrb[0].mxu0 %v408
        %v592 = vpop.f32.mrb[0].mxu0
        %v593 = vadd.f32 %v332, %v592
        %v594 = vpop.f32.mrb[0].mxu0
        %v595 = vpop.f32.mrb[0].mxu0
        %v596 = vadd.f32 %v332, %v595
        %v597 = vpop.f32.mrb[0].mxu0
        %598 = vmatprep.mubr.bf16.mxu0 0
        %599 = vmatmul.mubr.bf16.gmra.mrb[0].mxu0 %v409
        %v600 = vpop.f32.mrb[0].mxu0
        %v601 = vadd.f32 %v332, %v600
        %v602 = vpop.f32.mrb[0].mxu0
        %v603 = vpop.f32.mrb[0].mxu0
        %v604 = vadd.f32 %v332, %v603
        %v605 = vpop.f32.mrb[0].mxu0
        %606 = vmatprep.mubr.bf16.mxu0 0
        %607 = vmatmul.mubr.bf16.gmra.mrb[0].mxu0 %v410
        %v608 = vpop.f32.mrb[0].mxu0
        %v609 = vadd.f32 %v332, %v608
        %v610 = vpop.f32.mrb[0].mxu0
        %v611 = vpop.f32.mrb[0].mxu0
        %v612 = vadd.f32 %v332, %v611
        %v613 = vpop.f32.mrb[0].mxu0
        %614 = vmatprep.mubr.bf16.mxu0 0
        %615 = vmatmul.mubr.bf16.gmra.mrb[0].mxu0 %v411
        %v616 = vpop.f32.mrb[0].mxu0
        %v617 = vadd.f32 %v332, %v616
        %v618 = vpop.f32.mrb[0].mxu0
        %v619 = vpop.f32.mrb[0].mxu0
        %v620 = vadd.f32 %v332, %v619
        %v621 = vpop.f32.mrb[0].mxu0
        %622 = vmatprep.mubr.bf16.mxu0 0
        %623 = vmatmul.mubr.bf16.gmra.mrb[0].mxu0 %v412
        %v624 = vpop.f32.mrb[0].mxu0
        %v625 = vadd.f32 %v332, %v624
        %v626 = vpop.f32.mrb[0].mxu0
        %v627 = vpop.f32.mrb[0].mxu0
        %v628 = vadd.f32 %v332, %v627
        %v629 = vpop.f32.mrb[0].mxu0
        %630 = vmatprep.mubr.bf16.mxu0 0
        %631 = vmatmul.mubr.bf16.gmra.mrb[0].mxu0 %v413
        %v632 = vpop.f32.mrb[0].mxu0
        %v633 = vadd.f32 %v332, %v632
        %v634 = vpop.f32.mrb[0].mxu0
        %v635 = vpop.f32.mrb[0].mxu0
        %v636 = vadd.f32 %v332, %v635
        %v637 = vpop.f32.mrb[0].mxu0
        %638 = vdwg.mxu0
        %v639 = vmax.f32 %v513, 0.0
        %v640 = vmax.f32 %v516, 0.0
        %v641 = vmax.f32 %v521, 0.0
        %v642 = vmax.f32 %v524, 0.0
        %v643 = vmax.f32 %v529, 0.0
        %v644 = vmax.f32 %v532, 0.0
        %v645 = vmax.f32 %v537, 0.0
        %v646 = vmax.f32 %v540, 0.0
        %v647 = vmax.f32 %v545, 0.0
        %v648 = vmax.f32 %v548, 0.0
        %v649 = vmax.f32 %v553, 0.0
        %v650 = vmax.f32 %v556, 0.0
        %v651 = vmax.f32 %v561, 0.0
        %v652 = vmax.f32 %v564, 0.0
        %v653 = vmax.f32 %v569, 0.0
        %v654 = vmax.f32 %v572, 0.0
        %v655 = vmax.f32 %v577, 0.0
        %v656 = vmax.f32 %v580, 0.0
        %v657 = vmax.f32 %v585, 0.0
        %v658 = vmax.f32 %v588, 0.0
        %v659 = vmax.f32 %v593, 0.0
        %v660 = vmax.f32 %v596, 0.0
        %v661 = vmax.f32 %v601, 0.0
        %v662 = vmax.f32 %v604, 0.0
        %v663 = vmax.f32 %v609, 0.0
        %v664 = vmax.f32 %v612, 0.0
        %v665 = vmax.f32 %v617, 0.0
        %v666 = vmax.f32 %v620, 0.0
        %v667 = vmax.f32 %v625, 0.0
        %v668 = vmax.f32 %v628, 0.0
        %v669 = vmax.f32 %v633, 0.0
        %v670 = vmax.f32 %v636, 0.0
        %671 = vst [vmem:[%s261] sm:$0xff] %v639
        %672 = vst [vmem:[%s261 + $0x8] sm:$0xff] %v640
        %673 = vst [vmem:[%s261 + $0x10] sm:$0xff] %v641
        %674 = vst [vmem:[%s261 + $0x18] sm:$0xff] %v642
        %675 = vst [vmem:[%s261 + $0x20] sm:$0xff] %v643
        %676 = vst [vmem:[%s261 + $0x28] sm:$0xff] %v644
        %677 = vst [vmem:[%s261 + $0x30] sm:$0xff] %v645
        %678 = vst [vmem:[%s261 + $0x38] sm:$0xff] %v646
        %679 = vst [vmem:[%s261 + $0x40] sm:$0xff] %v647
        %680 = vst [vmem:[%s261 + $0x48] sm:$0xff] %v648
        %681 = vst [vmem:[%s261 + $0x50] sm:$0xff] %v649
        %682 = vst [vmem:[%s261 + $0x58] sm:$0xff] %v650
        %683 = vst [vmem:[%s261 + $0x60] sm:$0xff] %v651
        %684 = vst [vmem:[%s261 + $0x68] sm:$0xff] %v652
        %685 = vst [vmem:[%s261 + $0x70] sm:$0xff] %v653
        %686 = vst [vmem:[%s261 + $0x78] sm:$0xff] %v654
        %687 = vst [vmem:[%s261 + $0x80] sm:$0xff] %v655
        %688 = vst [vmem:[%s261 + $0x88] sm:$0xff] %v656
        %689 = vst [vmem:[%s261 + $0x90] sm:$0xff] %v657
        %690 = vst [vmem:[%s261 + $0x98] sm:$0xff] %v658
        %691 = vst [vmem:[%s261 + $0xa0] sm:$0xff] %v659
        %692 = vst [vmem:[%s261 + $0xa8] sm:$0xff] %v660
        %693 = vst [vmem:[%s261 + $0xb0] sm:$0xff] %v661
        %694 = vst [vmem:[%s261 + $0xb8] sm:$0xff] %v662
        %695 = vst [vmem:[%s261 + $0xc0] sm:$0xff] %v663
        %696 = vst [vmem:[%s261 + $0xc8] sm:$0xff] %v664
        %697 = vst [vmem:[%s261 + $0xd0] sm:$0xff] %v665
        %698 = vst [vmem:[%s261 + $0xd8] sm:$0xff] %v666
        %699 = vst [vmem:[%s261 + $0xe0] sm:$0xff] %v667
        %700 = vst [vmem:[%s261 + $0xe8] sm:$0xff] %v668
        %701 = vst [vmem:[%s261 + $0xf0] sm:$0xff] %v669
        %702 = vst [vmem:[%s261 + $0xf8] sm:$0xff] %v670
        %s703 = smul.u32 %s27, 256
        %v704 = vlaneseq
        %v705 = vshrl.u32 %v704, 7
        %v706 = vadd.s32 %v705, 8
        %v707 = vadd.s32 %v705, 16
        %v708 = vadd.s32 %v705, 24
        %v709 = vadd.s32 %v705, 32
        %v710 = vadd.s32 %v705, 40
        %v711 = vadd.s32 %v705, 48
        %v712 = vadd.s32 %v705, 56
        %v713 = vadd.s32 %v705, 64
        %v714 = vadd.s32 %v705, 72
        %v715 = vadd.s32 %v705, 80
        %v716 = vadd.s32 %v705, 88
        %v717 = vadd.s32 %v705, 96
        %v718 = vadd.s32 %v705, 104
        %v719 = vadd.s32 %v705, 112
        %v720 = vadd.s32 %v705, 120
        %v721 = vadd.s32 %v705, 128
        %v722 = vadd.s32 %v705, 136
        %v723 = vadd.s32 %v705, 144
        %v724 = vadd.s32 %v705, 152
        %v725 = vadd.s32 %v705, 160
        %v726 = vadd.s32 %v705, 168
        %v727 = vadd.s32 %v705, 176
        %v728 = vadd.s32 %v705, 184
        %v729 = vadd.s32 %v705, 192
        %v730 = vadd.s32 %v705, 200
        %v731 = vadd.s32 %v705, 208
        %v732 = vadd.s32 %v705, 216
        %v733 = vadd.s32 %v705, 224
        %v734 = vadd.s32 %v705, 232
        %v735 = vadd.s32 %v705, 240
        %v736 = vadd.s32 %v705, 248
        %v737 = vstv %s703
        %v738 = vadd.s32 %v737, %v705
        %v739 = vadd.s32 %v737, %v706
        %v740 = vadd.s32 %v737, %v707
        %v741 = vadd.s32 %v737, %v708
        %v742 = vadd.s32 %v737, %v709
        %v743 = vadd.s32 %v737, %v710
        %v744 = vadd.s32 %v737, %v711
        %v745 = vadd.s32 %v737, %v712
        %v746 = vadd.s32 %v737, %v713
        %v747 = vadd.s32 %v737, %v714
        %v748 = vadd.s32 %v737, %v715
        %v749 = vadd.s32 %v737, %v716
        %v750 = vadd.s32 %v737, %v717
        %v751 = vadd.s32 %v737, %v718
        %v752 = vadd.s32 %v737, %v719
        %v753 = vadd.s32 %v737, %v720
        %v754 = vadd.s32 %v737, %v721
        %v755 = vadd.s32 %v737, %v722
        %v756 = vadd.s32 %v737, %v723
        %v757 = vadd.s32 %v737, %v724
        %v758 = vadd.s32 %v737, %v725
        %v759 = vadd.s32 %v737, %v726
        %v760 = vadd.s32 %v737, %v727
        %v761 = vadd.s32 %v737, %v728
        %v762 = vadd.s32 %v737, %v729
        %v763 = vadd.s32 %v737, %v730
        %v764 = vadd.s32 %v737, %v731
        %v765 = vadd.s32 %v737, %v732
        %v766 = vadd.s32 %v737, %v733
        %v767 = vadd.s32 %v737, %v734
        %v768 = vadd.s32 %v737, %v735
        %v769 = vadd.s32 %v737, %v736
        %vm770 = vcmp.lt.s32.totalorder %v738, 512
        %vm771 = vcmp.lt.s32.totalorder %v739, 512
        %vm772 = vcmp.lt.s32.totalorder %v740, 512
        %vm773 = vcmp.lt.s32.totalorder %v741, 512
        %vm774 = vcmp.lt.s32.totalorder %v742, 512
        %vm775 = vcmp.lt.s32.totalorder %v743, 512
        %vm776 = vcmp.lt.s32.totalorder %v744, 512
        %vm777 = vcmp.lt.s32.totalorder %v745, 512
        %vm778 = vcmp.lt.s32.totalorder %v746, 512
        %vm779 = vcmp.lt.s32.totalorder %v747, 512
        %vm780 = vcmp.lt.s32.totalorder %v748, 512
        %vm781 = vcmp.lt.s32.totalorder %v749, 512
        %vm782 = vcmp.lt.s32.totalorder %v750, 512
        %vm783 = vcmp.lt.s32.totalorder %v751, 512
        %vm784 = vcmp.lt.s32.totalorder %v752, 512
        %vm785 = vcmp.lt.s32.totalorder %v753, 512
        %vm786 = vcmp.lt.s32.totalorder %v754, 512
        %vm787 = vcmp.lt.s32.totalorder %v755, 512
        %vm788 = vcmp.lt.s32.totalorder %v756, 512
        %vm789 = vcmp.lt.s32.totalorder %v757, 512
        %vm790 = vcmp.lt.s32.totalorder %v758, 512
        %vm791 = vcmp.lt.s32.totalorder %v759, 512
        %vm792 = vcmp.lt.s32.totalorder %v760, 512
        %vm793 = vcmp.lt.s32.totalorder %v761, 512
        %vm794 = vcmp.lt.s32.totalorder %v762, 512
        %vm795 = vcmp.lt.s32.totalorder %v763, 512
        %vm796 = vcmp.lt.s32.totalorder %v764, 512
        %vm797 = vcmp.lt.s32.totalorder %v765, 512
        %vm798 = vcmp.lt.s32.totalorder %v766, 512
        %vm799 = vcmp.lt.s32.totalorder %v767, 512
        %vm800 = vcmp.lt.s32.totalorder %v768, 512
        %vm801 = vcmp.lt.s32.totalorder %v769, 512
        %v802 = vsel %vm770, 1, 0
        %v803 = vsel %vm771, 1, 0
        %v804 = vsel %vm772, 1, 0
        %v805 = vsel %vm773, 1, 0
        %v806 = vsel %vm774, 1, 0
        %v807 = vsel %vm775, 1, 0
        %v808 = vsel %vm776, 1, 0
        %v809 = vsel %vm777, 1, 0
        %v810 = vsel %vm778, 1, 0
        %v811 = vsel %vm779, 1, 0
        %v812 = vsel %vm780, 1, 0
        %v813 = vsel %vm781, 1, 0
        %v814 = vsel %vm782, 1, 0
        %v815 = vsel %vm783, 1, 0
        %v816 = vsel %vm784, 1, 0
        %v817 = vsel %vm785, 1, 0
        %v818 = vsel %vm786, 1, 0
        %v819 = vsel %vm787, 1, 0
        %v820 = vsel %vm788, 1, 0
        %v821 = vsel %vm789, 1, 0
        %v822 = vsel %vm790, 1, 0
        %v823 = vsel %vm791, 1, 0
        %v824 = vsel %vm792, 1, 0
        %v825 = vsel %vm793, 1, 0
        %v826 = vsel %vm794, 1, 0
        %v827 = vsel %vm795, 1, 0
        %v828 = vsel %vm796, 1, 0
        %v829 = vsel %vm797, 1, 0
        %v830 = vsel %vm798, 1, 0
        %v831 = vsel %vm799, 1, 0
        %v832 = vsel %vm800, 1, 0
        %v833 = vsel %vm801, 1, 0
        %vm834 = vcmp.eq.s32.totalorder %v802, 1
        %vm835 = vcmp.eq.s32.totalorder %v803, 1
        %vm836 = vcmp.eq.s32.totalorder %v804, 1
        %vm837 = vcmp.eq.s32.totalorder %v805, 1
        %vm838 = vcmp.eq.s32.totalorder %v806, 1
        %vm839 = vcmp.eq.s32.totalorder %v807, 1
        %vm840 = vcmp.eq.s32.totalorder %v808, 1
        %vm841 = vcmp.eq.s32.totalorder %v809, 1
        %vm842 = vcmp.eq.s32.totalorder %v810, 1
        %vm843 = vcmp.eq.s32.totalorder %v811, 1
        %vm844 = vcmp.eq.s32.totalorder %v812, 1
        %vm845 = vcmp.eq.s32.totalorder %v813, 1
        %vm846 = vcmp.eq.s32.totalorder %v814, 1
        %vm847 = vcmp.eq.s32.totalorder %v815, 1
        %vm848 = vcmp.eq.s32.totalorder %v816, 1
        %vm849 = vcmp.eq.s32.totalorder %v817, 1
        %vm850 = vcmp.eq.s32.totalorder %v818, 1
        %vm851 = vcmp.eq.s32.totalorder %v819, 1
        %vm852 = vcmp.eq.s32.totalorder %v820, 1
        %vm853 = vcmp.eq.s32.totalorder %v821, 1
        %vm854 = vcmp.eq.s32.totalorder %v822, 1
        %vm855 = vcmp.eq.s32.totalorder %v823, 1
        %vm856 = vcmp.eq.s32.totalorder %v824, 1
        %vm857 = vcmp.eq.s32.totalorder %v825, 1
        %vm858 = vcmp.eq.s32.totalorder %v826, 1
        %vm859 = vcmp.eq.s32.totalorder %v827, 1
        %vm860 = vcmp.eq.s32.totalorder %v828, 1
        %vm861 = vcmp.eq.s32.totalorder %v829, 1
        %vm862 = vcmp.eq.s32.totalorder %v830, 1
        %vm863 = vcmp.eq.s32.totalorder %v831, 1
        %vm864 = vcmp.eq.s32.totalorder %v832, 1
        %vm865 = vcmp.eq.s32.totalorder %v833, 1
        %v866 = vsel %vm834, %v639, 0.0
        %v867 = vsel %vm835, %v640, 0.0
        %v868 = vsel %vm836, %v641, 0.0
        %v869 = vsel %vm837, %v642, 0.0
        %v870 = vsel %vm838, %v643, 0.0
        %v871 = vsel %vm839, %v644, 0.0
        %v872 = vsel %vm840, %v645, 0.0
        %v873 = vsel %vm841, %v646, 0.0
        %v874 = vsel %vm842, %v647, 0.0
        %v875 = vsel %vm843, %v648, 0.0
        %v876 = vsel %vm844, %v649, 0.0
        %v877 = vsel %vm845, %v650, 0.0
        %v878 = vsel %vm846, %v651, 0.0
        %v879 = vsel %vm847, %v652, 0.0
        %v880 = vsel %vm848, %v653, 0.0
        %v881 = vsel %vm849, %v654, 0.0
        %v882 = vsel %vm850, %v655, 0.0
        %v883 = vsel %vm851, %v656, 0.0
        %v884 = vsel %vm852, %v657, 0.0
        %v885 = vsel %vm853, %v658, 0.0
        %v886 = vsel %vm854, %v659, 0.0
        %v887 = vsel %vm855, %v660, 0.0
        %v888 = vsel %vm856, %v661, 0.0
        %v889 = vsel %vm857, %v662, 0.0
        %v890 = vsel %vm858, %v663, 0.0
        %v891 = vsel %vm859, %v664, 0.0
        %v892 = vsel %vm860, %v665, 0.0
        %v893 = vsel %vm861, %v666, 0.0
        %v894 = vsel %vm862, %v667, 0.0
        %v895 = vsel %vm863, %v668, 0.0
        %v896 = vsel %vm864, %v669, 0.0
        %v897 = vsel %vm865, %v670, 0.0
        %v898 = vadd.f32 %v866, %v867
        %v899 = vadd.f32 %v898, %v868
        %v900 = vadd.f32 %v899, %v869
        %v901 = vadd.f32 %v900, %v870
        %v902 = vadd.f32 %v901, %v871
        %v903 = vadd.f32 %v902, %v872
        %v904 = vadd.f32 %v903, %v873
        %v905 = vadd.f32 %v904, %v874
        %v906 = vadd.f32 %v905, %v875
        %v907 = vadd.f32 %v906, %v876
        %v908 = vadd.f32 %v907, %v877
        %v909 = vadd.f32 %v908, %v878
        %v910 = vadd.f32 %v909, %v879
        %v911 = vadd.f32 %v910, %v880
        %v912 = vadd.f32 %v911, %v881
        %v913 = vadd.f32 %v912, %v882
        %v914 = vadd.f32 %v913, %v883
        %v915 = vadd.f32 %v914, %v884
        %v916 = vadd.f32 %v915, %v885
        %v917 = vadd.f32 %v916, %v886
        %v918 = vadd.f32 %v917, %v887
        %v919 = vadd.f32 %v918, %v888
        %v920 = vadd.f32 %v919, %v889
        %v921 = vadd.f32 %v920, %v890
        %v922 = vadd.f32 %v921, %v891
        %v923 = vadd.f32 %v922, %v892
        %v924 = vadd.f32 %v923, %v893
        %v925 = vadd.f32 %v924, %v894
        %v926 = vadd.f32 %v925, %v895
        %v927 = vadd.f32 %v926, %v896
        %v928 = vadd.f32 %v927, %v897
        %v929 = vrot.slane %v928, 4
        %v930 = vadd.f32 %v928, %v929
        %v931 = vrot.slane %v930, 2
        %v932 = vadd.f32 %v930, %v931
        %v933 = vrot.slane %v932, 1
        %v934 = vadd.f32 %v932, %v933
        %v935 = vmul.f32 %v866, %v866
        %v936 = vmul.f32 %v867, %v867
        %v937 = vmul.f32 %v868, %v868
        %v938 = vmul.f32 %v869, %v869
        %v939 = vmul.f32 %v870, %v870
        %v940 = vmul.f32 %v871, %v871
        %v941 = vmul.f32 %v872, %v872
        %v942 = vmul.f32 %v873, %v873
        %v943 = vmul.f32 %v874, %v874
        %v944 = vmul.f32 %v875, %v875
        %v945 = vmul.f32 %v876, %v876
        %v946 = vmul.f32 %v877, %v877
        %v947 = vmul.f32 %v878, %v878
        %v948 = vmul.f32 %v879, %v879
        %v949 = vmul.f32 %v880, %v880
        %v950 = vmul.f32 %v881, %v881
        %v951 = vmul.f32 %v882, %v882
        %v952 = vmul.f32 %v883, %v883
        %v953 = vmul.f32 %v884, %v884
        %v954 = vmul.f32 %v885, %v885
        %v955 = vmul.f32 %v886, %v886
        %v956 = vmul.f32 %v887, %v887
        %v957 = vmul.f32 %v888, %v888
        %v958 = vmul.f32 %v889, %v889
        %v959 = vmul.f32 %v890, %v890
        %v960 = vmul.f32 %v891, %v891
        %v961 = vmul.f32 %v892, %v892
        %v962 = vmul.f32 %v893, %v893
        %v963 = vmul.f32 %v894, %v894
        %v964 = vmul.f32 %v895, %v895
        %v965 = vmul.f32 %v896, %v896
        %v966 = vmul.f32 %v897, %v897
        %v967 = vadd.f32 %v935, %v936
        %v968 = vadd.f32 %v967, %v937
        %v969 = vadd.f32 %v968, %v938
        %v970 = vadd.f32 %v969, %v939
        %v971 = vadd.f32 %v970, %v940
        %v972 = vadd.f32 %v971, %v941
        %v973 = vadd.f32 %v972, %v942
        %v974 = vadd.f32 %v973, %v943
        %v975 = vadd.f32 %v974, %v944
        %v976 = vadd.f32 %v975, %v945
        %v977 = vadd.f32 %v976, %v946
        %v978 = vadd.f32 %v977, %v947
        %v979 = vadd.f32 %v978, %v948
        %v980 = vadd.f32 %v979, %v949
        %v981 = vadd.f32 %v980, %v950
        %v982 = vadd.f32 %v981, %v951
        %v983 = vadd.f32 %v982, %v952
        %v984 = vadd.f32 %v983, %v953
        %v985 = vadd.f32 %v984, %v954
        %v986 = vadd.f32 %v985, %v955
        %v987 = vadd.f32 %v986, %v956
        %v988 = vadd.f32 %v987, %v957
        %v989 = vadd.f32 %v988, %v958
        %v990 = vadd.f32 %v989, %v959
        %v991 = vadd.f32 %v990, %v960
        %v992 = vadd.f32 %v991, %v961
        %v993 = vadd.f32 %v992, %v962
        %v994 = vadd.f32 %v993, %v963
        %v995 = vadd.f32 %v994, %v964
        %v996 = vadd.f32 %v995, %v965
        %v997 = vadd.f32 %v996, %v966
        %v998 = vrot.slane %v997, 4
        %v999 = vadd.f32 %v997, %v998
        %v1000 = vrot.slane %v999, 2
        %v1001 = vadd.f32 %v999, %v1000
        %v1002 = vrot.slane %v1001, 1
        %v1003 = vadd.f32 %v1001, %v1002
        %1004 = vst [vmem:[%s268] sm:$0xff] %v934
        %1005 = vst [vmem:[%s275] sm:$0xff] %v1003
        %s1006 = sand.u32 %s103, 1
        %s1007 = scalar_lea.sflag [#allocation4], %s1006
        %s1008 = sand.u32 %s103, 1
        %s1009 = smul.addr %s1008, 256
        %s1010 = scalar_lea.vmem [#allocation7], %s1009
        %s1011 = sand.u32 %s27, 1
        %s1012 = scalar_lea.sflag [#allocation9], %s1011
        %s1013 = sand.u32 %s129, 1
        %s1014 = smul.addr %s1013, 8
        %s1015 = scalar_lea.vmem [#allocation8], %s1014
        %s1016 = sand.u32 %s27, 1
        %s1017 = scalar_lea.sflag [#allocation9], %s1016
        %s1018 = sand.u32 %s155, 1
        %s1019 = smul.addr %s1018, 8
        %s1020 = scalar_lea.vmem [#allocation10], %s1019
        // Predicated region
        $region41: #{tpu_custom_call.1} parent=31 // pred_check
          %p1021 = pneg %p113
        $region42: #{tpu_custom_call.1} parent=31 // pred_check_branch
          %1023 = sbr.rel (%p1021) target = $region44
        $region43: #{tpu_custom_call.1} parent=31 // pred_region
          %s1024 = smul.u32 32, %s27
          %s1026 = ssub.s32 4096, 4096
          %1027 = vsyncadd %s1007, %s1026
          %s1028 = smul.addr %s1024, 128
          %s1029 = scalar_lea.hbm %s3, %s1028
          %s1030 = sshll.u32 %s1010, 4
          %s1031 = int_to_ptr.vmem [resolvable:$true] %s1030
          %1036 = dma.vmem_to_hbm [thread:$0]  %s1031, 4096, %s1029, %s1007, 128, 128, 8
        $region44: #{tpu_custom_call.1} parent=31 // pred_fallthru
          _
        // Predicated region
        $region45: #{tpu_custom_call.1} parent=31 // pred_check
          %p1037 = pneg %p139
        $region46: #{tpu_custom_call.1} parent=31 // pred_check_branch
          %1039 = sbr.rel (%p1037) target = $region48
        $region47: #{tpu_custom_call.1} parent=31 // pred_region
          %s1041 = ssub.s32 128, 128
          %1042 = vsyncadd %s1012, %s1041
          %s1043 = smul.addr %s27, 128
          %s1044 = scalar_lea.hbm %s4, %s1043
          %s1046 = sshll.u32 %s1015, 4
          %s1047 = int_to_ptr.vmem [resolvable:$true] %s1046
          %1049 = dma.vmem_to_hbm [thread:$0]  %s1047, 128, %s1044, %s1012
        $region48: #{tpu_custom_call.1} parent=31 // pred_fallthru
          _
        // Predicated region
        $region49: #{tpu_custom_call.1} parent=31 // pred_check
          %p1050 = pneg %p165
        $region50: #{tpu_custom_call.1} parent=31 // pred_check_branch
          %1052 = sbr.rel (%p1050) target = $region52
        $region51: #{tpu_custom_call.1} parent=31 // pred_region
          %s1054 = ssub.s32 128, 128
          %1055 = vsyncadd %s1017, %s1054
          %s1056 = smul.addr %s27, 128
          %s1057 = scalar_lea.hbm %s5, %s1056
          %s1059 = sshll.u32 %s1020, 4
          %s1060 = int_to_ptr.vmem [resolvable:$true] %s1059
          %1062 = dma.vmem_to_hbm [thread:$0]  %s1060, 128, %s1057, %s1017
        $region52: #{tpu_custom_call.1} parent=31 // pred_fallthru
          _
      $region32: #{tpu_custom_call.1} parent=5 // pred_fallthru
        _
      %p1063 = scmp.le.s32.totalorder 2, %s22
      // Predicated region
      $region53: #{tpu_custom_call.1} parent=5 // pred_check
        %p1064 = pneg %p1063
      $region54: #{tpu_custom_call.1} parent=5 // pred_check_branch
        %1066 = sbr.rel (%p1064) target = $region56
      $region55: #{tpu_custom_call.1} parent=5 // pred_region
        %s1067 = ssub.s32 %s22, 2
        // Predicated region
        $region57: #{tpu_custom_call.1} parent=55 // pred_check
          %p1068 = pneg %p119
        $region58: #{tpu_custom_call.1} parent=55 // pred_check_branch
          %1070 = sbr.rel (%p1068) target = $region60
        $region59: #{tpu_custom_call.1} parent=55 // pred_region
          %s1071 = sand.u32 %s104, 1
          %s1072 = scalar_lea.sflag [#allocation4], %s1071
          %s1073 = sand.u32 %s104, 1
          %s1074 = smul.addr %s1073, 256
          %s1075 = scalar_lea.vmem [#allocation7], %s1074
          %1076 = dma.done %s1072, 4096
        $region60: #{tpu_custom_call.1} parent=55 // pred_fallthru
          _
        // Predicated region
        $region61: #{tpu_custom_call.1} parent=55 // pred_check
          %p1077 = pneg %p145
        $region62: #{tpu_custom_call.1} parent=55 // pred_check_branch
          %1079 = sbr.rel (%p1077) target = $region64
        $region63: #{tpu_custom_call.1} parent=55 // pred_region
          %s1080 = sand.u32 %s28, 1
          %s1081 = scalar_lea.sflag [#allocation9], %s1080
          %s1082 = sand.u32 %s130, 1
          %s1083 = smul.addr %s1082, 8
          %s1084 = scalar_lea.vmem [#allocation8], %s1083
          %1085 = dma.done %s1081, 128
        $region64: #{tpu_custom_call.1} parent=55 // pred_fallthru
          _
        // Predicated region
        $region65: #{tpu_custom_call.1} parent=55 // pred_check
          %p1086 = pneg %p171
        $region66: #{tpu_custom_call.1} parent=55 // pred_check_branch
          %1088 = sbr.rel (%p1086) target = $region68
        $region67: #{tpu_custom_call.1} parent=55 // pred_region
          %s1089 = sand.u32 %s28, 1
          %s1090 = scalar_lea.sflag [#allocation9], %s1089
          %s1091 = sand.u32 %s156, 1
          %s1092 = smul.addr %s1091, 8
          %s1093 = scalar_lea.vmem [#allocation10], %s1092
          %1094 = dma.done %s1090, 128
        $region68: #{tpu_custom_call.1} parent=55 // pred_fallthru
          _
      $region56: #{tpu_custom_call.1} parent=5 // pred_fallthru
        _
    $region6: #{tpu_custom_call.1} parent=1 // loop_footer
      %s26 = sadd.s32 1, %s22
    $region7: #{tpu_custom_call.1} parent=1 // loop_footer_branch
      %21 = sbr.rel target = $region3
    $region8: #{tpu_custom_call.1} parent=1 // loop_exit
      _
    %1095 = vsyncpa [#allocation3], 1
    %s1096 = scalar_lea.sflag [#allocation3], 1
    %1097 = vsyncpa %s1096, 1
    %1098 = vsyncpa [#allocation6], 1
    %1099 = vsyncpa [#allocation4], 1
    %s1100 = scalar_lea.sflag [#allocation4], 1
    %1101 = vsyncpa %s1100, 1
    %1102 = vsyncpa [#allocation9], 1
    %s1103 = scalar_lea.sflag [#allocation9], 1
    %1104 = vsyncpa %s1103, 1

</llo_original>
